<compile_context>
chip_gen: v6e
topology: v6e:2x2x1
jax: 0.10.0
libtpu: 0.0.40
codegen_flags: <defaults>
</compile_context>

<pallas_src>
import functools

import jax
import jax.numpy as jnp
from jax.experimental import pallas as pl
from jax.experimental.pallas import tpu as pltpu

FP8_E4M3_MAX = 448.0
_MIB = 1024 * 1024


def _round_up(a, b):
    return (a + b - 1) // b * b


def _default_tm():
    # v6e/v7x: larger tm amortizes the fixed per-step weight DMA (v1 was
    # weight-HBM-bound at tm=128).  v5e (197 TF/s, ~0.82 TB/s) is already
    # balanced at tm=128; bigger tm only adds VMEM pressure there.
    try:
        kind = jax.devices()[0].device_kind.lower()
    except Exception:
        kind = ""
    if "v5 lite" in kind or "v5e" in kind or "v5lite" in kind:
        return 128
    return 256


def _choose_k_tiling(K, tk=None):
    """Returns (K_pad, tk): single K block up to 4096, else 2048-wide tiles."""
    if tk is not None:
        tk = max(128, _round_up(int(tk), 128))
        return _round_up(K, tk), tk
    K_pad = _round_up(K, 128)
    if K_pad <= 4096:
        return K_pad, K_pad
    return _round_up(K, 2048), 2048


def _pick_quant_tm(M_pad, K_pad):
    """Row-tile for the quantization kernel: biggest divisor of M_pad whose
    working set (in + fp8 out double-buffered + f32 temp) stays ~<= 24 MiB."""
    budget = 24 * _MIB
    for c in (256, 128, 64, 32, 16, 8):
        if M_pad % c == 0 and (c * K_pad * 12 <= budget or c <= 32):
            return c
    return M_pad


# --------------------------------------------------------------------------
# Kernel 1: per-row dynamic fp8 quantization of the activations (runs once).
# --------------------------------------------------------------------------
def _quantize_activations_kernel(x_ref, xq_ref, xs_ref):
    x = x_ref[...]                                              # (tm, K) in dt
    # abs/max are exact in the input dtype; only the (tm,1) scale is f32.
    absmax = jnp.max(jnp.abs(x), axis=-1, keepdims=True).astype(jnp.float32)
    x_scale = jnp.where(absmax > 0.0, absmax / FP8_E4M3_MAX,
                        jnp.ones_like(absmax))                   # (tm, 1)
    inv_scale = 1.0 / x_scale          # exact reciprocal, only tm elements
    x_q = jnp.clip(x.astype(jnp.float32) * inv_scale,
                   -FP8_E4M3_MAX, FP8_E4M3_MAX)
    xq_ref[...] = x_q.astype(jnp.float8_e4m3fn)
    xs_ref[...] = x_scale


def _quantize_activations(x2d_padded):
    M_pad, K_pad = x2d_padded.shape
    tm_q = _pick_quant_tm(M_pad, K_pad)
    xb = jnp.dtype(x2d_padded.dtype).itemsize
    est = tm_q * K_pad * (2 * xb + 2 * 1 + 4 + 4) + tm_q * 16
    vmem_limit = int(min(48 * _MIB, max(32 * _MIB, 2 * est + 2 * _MIB)))
    return pl.pallas_call(
        _quantize_activations_kernel,
        out_shape=(jax.ShapeDtypeStruct((M_pad, K_pad), jnp.float8_e4m3fn),
                   jax.ShapeDtypeStruct((M_pad, 1), jnp.float32)),
        grid_spec=pltpu.PrefetchScalarGridSpec(
            num_scalar_prefetch=0,
            grid=(M_pad // tm_q,),
            in_specs=[pl.BlockSpec((tm_q, K_pad), lambda i: (i, 0))],
            out_specs=[pl.BlockSpec((tm_q, K_pad), lambda i: (i, 0)),
                       pl.BlockSpec((tm_q, 1), lambda i: (i, 0))]),
        compiler_params=pltpu.CompilerParams(
            dimension_semantics=("parallel",),
            vmem_limit_bytes=vmem_limit),
    )(x2d_padded)


# --------------------------------------------------------------------------
# Kernel 2: tiled fp8 matmul with fused dequant + bias, K-tiled accumulation.
# --------------------------------------------------------------------------
def _make_fp8_matmul_kernel(has_bias, native_fp8):
    def kernel(xq_ref, xs_ref, w_ref, wscale_ref, *rest):
        # xq_ref:     (tm, tk)  fp8 activation codes
        # xs_ref:     (tm, 1)   per-row activation scales (f32)
        # w_ref:      (tk, tn)  fp8 weight tile (pre-transposed, K-first)
        # wscale_ref: (1, tn)   per-output-channel weight scales (f32)
        # bias_ref:   (1, tn)   optional
        # o_ref:      (tm, tn)  output tile (activation dtype)
        # acc_ref:    (tm, tn)  f32 VMEM accumulator
        if has_bias:
            bias_ref, o_ref, acc_ref = rest
        else:
            bias_ref = None
            o_ref, acc_ref = rest

        k = pl.program_id(2)

        @pl.when(k == 0)
        def _():
            acc_ref[...] = jnp.zeros_like(acc_ref)

        if native_fp8:
            a = xq_ref[...]
            b = w_ref[...]
        else:
            # fp8 -> bf16 is exact; MXU runs full-rate bf16 with f32 acc.
            a = xq_ref[...].astype(jnp.bfloat16)
            b = w_ref[...].astype(jnp.bfloat16)
        acc_ref[...] += jnp.dot(a, b, preferred_element_type=jnp.float32)

        @pl.when(k == pl.num_programs(2) - 1)
        def _():
            out = acc_ref[...] * xs_ref[...] * wscale_ref[...]
            if has_bias:
                out = out + bias_ref[...]
            o_ref[...] = out.astype(o_ref.dtype)

    return kernel


def _weight_block_spec(tk, tn, index_map, multibuffer):
    # TODO(synk): default-enable Buffered(3) for decode-sized M on v7x once
    # validated on that chip (hides weight-DMA issue latency at 3.2 TB/s).
    if multibuffer and hasattr(pl, "Buffered"):
        try:
            return pl.BlockSpec((tk, tn), index_map,
                                pipeline_mode=pl.Buffered(3))
        except TypeError:
            pass
    return pl.BlockSpec((tk, tn), index_map)


# --------------------------------------------------------------------------
# Offline weight preparation (run once per layer, outside the forward / jit).
# --------------------------------------------------------------------------
def prepare_fp8_linear_params(weight_fp8, w_scales, bias=None, *, tk=None):
    """Pads N -> multiple of 128 and K -> multiple of the K tile, and
    transposes the fp8 weight to (K_pad, N_pad) so the kernel uses a standard
    K-first contraction (no in-kernel transposes, no per-call weight pad)."""
    N, K = weight_fp8.shape
    K_pad, tk = _choose_k_tiling(K, tk)
    N_pad = _round_up(N, 128)

    w = weight_fp8
    if (N_pad != N) or (K_pad != K):
        w = jnp.pad(w, ((0, N_pad - N), (0, K_pad - K)))
    w_t = jnp.transpose(w, (1, 0))                       # (K_pad, N_pad), fp8

    scales2d = w_scales.reshape(1, N).astype(jnp.float32)
    if N_pad != N:
        scales2d = jnp.pad(scales2d, ((0, 0), (0, N_pad - N)),
                           constant_values=1.0)
    bias2d = None
    if bias is not None:
        bias2d = bias.reshape(1, N).astype(jnp.float32)
        if N_pad != N:
            bias2d = jnp.pad(bias2d, ((0, 0), (0, N_pad - N)))

    meta = dict(out_features=N, in_features=K, tk=tk)
    return w_t, scales2d, bias2d, meta


# --------------------------------------------------------------------------
# Forward with pre-prepared (padded / transposed) parameters.
# --------------------------------------------------------------------------
def fp8_linear_prepared(x, w_t_fp8, w_scales_2d, bias_2d=None, *,
                        out_features, tk=None, tm=None, tn=256,
                        native_fp8_mxu=False, weight_multibuffer=False):
    """x: (..., K).  w_t_fp8: (K_pad, N_pad) float8_e4m3fn from
    prepare_fp8_linear_params.  Returns (..., out_features) in x.dtype."""
    orig_shape = x.shape
    K = orig_shape[-1]
    K_pad, N_pad = w_t_fp8.shape
    N = out_features
    assert K_pad >= K and N_pad >= N and N_pad % 128 == 0

    x2d = x.reshape(-1, K)
    M = x2d.shape[0]

    # --- tile sizes --------------------------------------------------------
    if tm is None:
        tm = _default_tm()
    tm_eff = max(8, min(tm, _round_up(max(M, 1), 32)))
    M_pad = _round_up(M, tm_eff)

    tn_eff = max(128, (min(tn, N_pad) // 128) * 128)
    while N_pad % tn_eff:
        tn_eff -= 128

    if tk is None:
        tk = K_pad if K_pad <= 4096 else 2048
    tk_eff = tk if K_pad % tk == 0 else K_pad

    # --- pad activations and quantize them ONCE ----------------------------
    if (M_pad != M) or (K_pad != K):
        x2d = jnp.pad(x2d, ((0, M_pad - M), (0, K_pad - K)))
    x_q, x_scale = _quantize_activations(x2d)

    has_bias = bias_2d is not None

    # --- VMEM budget (tiles + in-kernel intermediates, 48 MiB cap) ----------
    xb = jnp.dtype(x.dtype).itemsize
    w_bufs = 3 if weight_multibuffer else 2
    est = (2 * tm_eff * tk_eff * 1            # x_q tiles (fp8, double-buffered)
           + 2 * tm_eff * 4                   # x_scale tiles
           + w_bufs * tk_eff * tn_eff * 1     # weight tiles (fp8)
           + 4 * tn_eff * 4                   # w_scales + bias tiles
           + 2 * tm_eff * tn_eff * xb         # output tiles
           + tm_eff * tn_eff * 4              # f32 accumulator scratch
           + tm_eff * tn_eff * 4)             # f32 dequant temporary
    if not native_fp8_mxu:
        est += tm_eff * tk_eff * 2 + tk_eff * tn_eff * 2   # bf16 upcast copies
    vmem_limit = int(min(48 * _MIB, max(32 * _MIB, 2 * est + 2 * _MIB)))

    # --- pallas call --------------------------------------------------------
    in_specs = [
        pl.BlockSpec((tm_eff, tk_eff), lambda i, j, k: (i, k)),   # x_q
        pl.BlockSpec((tm_eff, 1), lambda i, j, k: (i, 0)),        # x_scale
        _weight_block_spec(tk_eff, tn_eff, lambda i, j, k: (k, j),
                           weight_multibuffer),                   # weight (K,N)
        pl.BlockSpec((1, tn_eff), lambda i, j, k: (0, j)),        # w scales
    ]
    args = [x_q, x_scale, w_t_fp8, w_scales_2d]
    if has_bias:
        in_specs.append(pl.BlockSpec((1, tn_eff), lambda i, j, k: (0, j)))
        args.append(bias_2d)

    out = pl.pallas_call(
        _make_fp8_matmul_kernel(has_bias, native_fp8_mxu),
        out_shape=jax.ShapeDtypeStruct((M_pad, N_pad), x.dtype),
        grid_spec=pltpu.PrefetchScalarGridSpec(
            num_scalar_prefetch=0,
            grid=(M_pad // tm_eff, N_pad // tn_eff, K_pad // tk_eff),
            in_specs=in_specs,
            out_specs=pl.BlockSpec((tm_eff, tn_eff), lambda i, j, k: (i, j)),
            scratch_shapes=[pltpu.VMEM((tm_eff, tn_eff), jnp.float32)]),
        compiler_params=pltpu.CompilerParams(
            dimension_semantics=("parallel", "parallel", "arbitrary"),
            vmem_limit_bytes=vmem_limit),
    )(*args)

    out = out[:M, :N]
    return out.reshape(*orig_shape[:-1], N)


def fp8_linear(x, weight_fp8, w_scales, bias=None, *, use_hadamard=False,
               tm=None, tn=256, tk=None, native_fp8_mxu=False,
               weight_multibuffer=False):
    """One-shot API matching FP8Linear.forward.  For production use
    prepare_fp8_linear_params once + fp8_linear_prepared (avoids re-padding /
    transposing the full weight on every call under jit)."""
    # TODO(synk): hadamard-transform path (use_hadamard=True) not implemented.
    assert not use_hadamard
    w_t, scales2d, bias2d, meta = prepare_fp8_linear_params(
        weight_fp8, w_scales, bias, tk=tk)
    return fp8_linear_prepared(
        x, w_t, scales2d, bias2d, out_features=meta["out_features"],
        tk=meta["tk"], tm=tm, tn=tn, native_fp8_mxu=native_fp8_mxu,
        weight_multibuffer=weight_multibuffer)


# --------------------------------------------------------------------------
# Pure-JAX references (quantizer parity + forward correctness check).
# --------------------------------------------------------------------------
def quantize_fp8_rowwise(w):
    """Reference of Q8F.quantizer.quantize_fp8: per-row absmax quantization."""
    w = w.astype(jnp.float32)
    absmax = jnp.max(jnp.abs(w), axis=-1, keepdims=True)
    scale = jnp.where(absmax > 0.0, absmax / FP8_E4M3_MAX, 1.0)
    w_q = jnp.clip(w / scale, -FP8_E4M3_MAX,
                   FP8_E4M3_MAX).astype(jnp.float8_e4m3fn)
    return w_q, scale[:, 0]


def reference_fp8_linear(x, weight_fp8, w_scales, bias):
    x32 = x.astype(jnp.float32)
    absmax = jnp.max(jnp.abs(x32), axis=-1, keepdims=True)
    x_scale = jnp.where(absmax > 0.0, absmax / FP8_E4M3_MAX, 1.0)
    x_q = jnp.clip(x32 / x_scale, -FP8_E4M3_MAX, FP8_E4M3_MAX)
    x_q = x_q.astype(jnp.float8_e4m3fn).astype(jnp.float32)
    acc = x_q @ weight_fp8.astype(jnp.float32).T
    out = acc * x_scale * w_scales[None, :].astype(jnp.float32)
    if bias is not None:
        out = out + bias[None, :].astype(jnp.float32)
    return out.astype(x.dtype)


def _check(name, y, y_ref, rel=5e-2):
    err = float(jnp.max(jnp.abs(y.astype(jnp.float32)
                                - y_ref.astype(jnp.float32))))
    scale = float(jnp.max(jnp.abs(y_ref.astype(jnp.float32)))) + 1e-6
    assert err <= rel * scale + 1e-3, f"{name}: err={err}, ref scale={scale}"


if __name__ == "__main__":
    key = jax.random.PRNGKey(0)
    k1, k2, k3, k4, k5, k6 = jax.random.split(key, 6)

    # ---- test 1: small shapes, bias, single tile per grid axis -------------
    batch, seq, in_f, out_f = 2, 8, 32, 32
    w_bf16 = (jax.random.normal(k1, (out_f, in_f), jnp.float32) * 0.05
              ).astype(jnp.bfloat16)
    weight_fp8, w_scales = quantize_fp8_rowwise(w_bf16)
    bias = jax.random.normal(k2, (out_f,), jnp.float32) * 0.1
    x = jax.random.normal(k3, (batch, seq, in_f),
                          jnp.float32).astype(jnp.bfloat16)

    w_t, scales2d, bias2d, meta = prepare_fp8_linear_params(
        weight_fp8, w_scales, bias)
    fwd = jax.jit(functools.partial(
        fp8_linear_prepared, out_features=meta["out_features"],
        tk=meta["tk"]))
    y = jax.block_until_ready(fwd(x, w_t, scales2d, bias2d))
    assert y.shape == (batch, seq, out_f) and y.dtype == x.dtype
    y_ref = reference_fp8_linear(x.reshape(-1, in_f), weight_fp8, w_scales,
                                 bias).reshape(y.shape)
    _check("bias", y, y_ref)

    # ---- no-bias variant via the one-shot API -------------------------------
    y_nb = jax.block_until_ready(
        jax.jit(functools.partial(fp8_linear, use_hadamard=False))(
            x, weight_fp8, w_scales, None))
    y_nb_ref = reference_fp8_linear(x.reshape(-1, in_f), weight_fp8, w_scales,
                                    None).reshape(y_nb.shape)
    _check("no-bias", y_nb, y_nb_ref)

    # ---- test 2: non-multiple-of-128 K/N, padding + M/N/K tiling ------------
    batch2, seq2, in_f2, out_f2 = 3, 24, 200, 160
    w2_bf16 = (jax.random.normal(k4, (out_f2, in_f2), jnp.float32) * 0.05
               ).astype(jnp.bfloat16)
    weight2_fp8, w2_scales = quantize_fp8_rowwise(w2_bf16)
    bias2 = jax.random.normal(k5, (out_f2,), jnp.float32) * 0.1
    x2 = jax.random.normal(k6, (batch2, seq2, in_f2),
                           jnp.float32).astype(jnp.bfloat16)

    w2_t, s2d, b2d, meta2 = prepare_fp8_linear_params(
        weight2_fp8, w2_scales, bias2, tk=128)
    fwd2 = jax.jit(functools.partial(
        fp8_linear_prepared, out_features=meta2["out_features"],
        tk=meta2["tk"], tm=32, tn=128))
    y2 = jax.block_until_ready(fwd2(x2, w2_t, s2d, b2d))
    assert y2.shape == (batch2, seq2, out_f2) and y2.dtype == x2.dtype
    y2_ref = reference_fp8_linear(x2.reshape(-1, in_f2), weight2_fp8,
                                  w2_scales, bias2).reshape(y2.shape)
    _check("tiled", y2, y2_ref)

    print("KERNEL_OK")
</pallas_src>

<mosaic_0001>
module attributes {stable_mosaic.version = 11 : i64} {
  func.func @_quantize_activations_kernel(%arg0: i32, %arg1: memref<32x128xbf16, #tpu.memory_space<vmem>>, %arg2: memref<32x128xf8E4M3FN, #tpu.memory_space<vmem>>, %arg3: memref<32x1xf32, #tpu.memory_space<vmem>>) attributes {dimension_semantics = [#tpu.dimension_semantics<parallel>], iteration_bounds = array<i64: 1>, scalar_prefetch = 0 : i64, scratch_operands = 0 : i64, tpu.core_type = #tpu.core_type<tc>, window_params = [{transform_indices = @transform_0, window_bounds = array<i64: 32, 128>}, {transform_indices = @transform_1, window_bounds = array<i64: 32, 128>}, {transform_indices = @transform_2, window_bounds = array<i64: 32, 1>}]} {
    %c0 = arith.constant 0 : index
    %c0_0 = arith.constant 0 : index
    %0 = vector.load %arg1[%c0, %c0_0] : memref<32x128xbf16, #tpu.memory_space<vmem>>, vector<32x128xbf16>
    %1 = math.absf %0 : vector<32x128xbf16>
    %cst = arith.constant dense<0xFF80> : vector<32xbf16>
    %2 = vector.multi_reduction <maximumf>, %1, %cst [1] : vector<32x128xbf16> to vector<32xbf16>
    %3 = vector.shape_cast %2 : vector<32xbf16> to vector<32x1xbf16>
    %4 = arith.extf %3 : vector<32x1xbf16> to vector<32x1xf32>
    %cst_1 = arith.constant 0.000000e+00 : f32
    %5 = vector.broadcast %cst_1 : f32 to vector<32x1xf32>
    %6 = arith.cmpf ogt, %4, %5 : vector<32x1xf32>
    %cst_2 = arith.constant 4.480000e+02 : f32
    %7 = vector.broadcast %cst_2 : f32 to vector<32x1xf32>
    %8 = arith.divf %4, %7 : vector<32x1xf32>
    %cst_3 = arith.constant 1.000000e+00 : f32
    %9 = vector.broadcast %cst_3 : f32 to vector<32x1xf32>
    %10 = arith.select %6, %8, %9 : vector<32x1xi1>, vector<32x1xf32>
    %cst_4 = arith.constant 1.000000e+00 : f32
    %11 = vector.broadcast %cst_4 : f32 to vector<32x1xf32>
    %12 = arith.divf %11, %10 : vector<32x1xf32>
    %13 = arith.extf %0 : vector<32x128xbf16> to vector<32x128xf32>
    %14 = vector.broadcast %12 : vector<32x1xf32> to vector<32x128xf32>
    %15 = arith.mulf %13, %14 : vector<32x128xf32>
    %cst_5 = arith.constant -4.480000e+02 : f32
    %cst_6 = arith.constant 4.480000e+02 : f32
    %16 = vector.broadcast %cst_5 : f32 to vector<32x128xf32>
    %17 = arith.maximumf %16, %15 : vector<32x128xf32>
    %18 = vector.broadcast %cst_6 : f32 to vector<32x128xf32>
    %19 = arith.minimumf %18, %17 : vector<32x128xf32>
    %20 = arith.truncf %19 : vector<32x128xf32> to vector<32x128xf8E4M3FN>
    %c0_7 = arith.constant 0 : index
    %c0_8 = arith.constant 0 : index
    %21 = vector.load %arg2[%c0_7, %c0_8] : memref<32x128xf8E4M3FN, #tpu.memory_space<vmem>>, vector<32x128xf8E4M3FN>
    tpu.vector_store %arg2[%c0_7, %c0_8], %20 {strides = array<i32>} : memref<32x128xf8E4M3FN, #tpu.memory_space<vmem>>, vector<32x128xf8E4M3FN>,
    %c0_9 = arith.constant 0 : index
    %c0_10 = arith.constant 0 : index
    %22 = vector.load %arg3[%c0_9, %c0_10] : memref<32x1xf32, #tpu.memory_space<vmem>>, vector<32x1xf32>
    tpu.vector_store %arg3[%c0_9, %c0_10], %10 {strides = array<i32>} : memref<32x1xf32, #tpu.memory_space<vmem>>, vector<32x1xf32>,
    return
  }
  func.func @transform_0(%arg0: i32) -> (i32, i32) {
    %c0_i32 = arith.constant 0 : i32
    %c0_i32_0 = arith.constant 0 : i32
    return %arg0, %c0_i32 : i32, i32
  }
  func.func @transform_1(%arg0: i32) -> (i32, i32) {
    %c0_i32 = arith.constant 0 : i32
    %c0_i32_0 = arith.constant 0 : i32
    return %arg0, %c0_i32 : i32, i32
  }
  func.func @transform_2(%arg0: i32) -> (i32, i32) {
    %c0_i32 = arith.constant 0 : i32
    %c0_i32_0 = arith.constant 0 : i32
    return %arg0, %c0_i32 : i32, i32
  }
}

module attributes {stable_mosaic.version = 11 : i64} {
  func.func @kernel(%arg0: i32, %arg1: i32, %arg2: i32, %arg3: memref<32x128xf8E4M3FN, #tpu.memory_space<vmem>>, %arg4: memref<32x1xf32, #tpu.memory_space<vmem>>, %arg5: memref<128x128xf8E4M3FN, #tpu.memory_space<vmem>>, %arg6: memref<1x128xf32, #tpu.memory_space<vmem>>, %arg7: memref<1x128xf32, #tpu.memory_space<vmem>>, %arg8: memref<32x128xbf16, #tpu.memory_space<vmem>>, %arg9: memref<32x128xf32, #tpu.memory_space<vmem>>) attributes {dimension_semantics = [#tpu.dimension_semantics<parallel>, #tpu.dimension_semantics<parallel>, #tpu.dimension_semantics<arbitrary>], iteration_bounds = array<i64: 1, 1, 1>, scalar_prefetch = 0 : i64, scratch_operands = 1 : i64, tpu.core_type = #tpu.core_type<tc>, window_params = [{transform_indices = @transform_0, window_bounds = array<i64: 32, 128>}, {transform_indices = @transform_1, window_bounds = array<i64: 32, 1>}, {transform_indices = @transform_2, window_bounds = array<i64: 128, 128>}, {transform_indices = @transform_3, window_bounds = array<i64: 1, 128>}, {transform_indices = @transform_4, window_bounds = array<i64: 1, 128>}, {transform_indices = @transform_5, window_bounds = array<i64: 32, 128>}]} {
    %c0_i32 = arith.constant 0 : i32
    %0 = arith.cmpi eq, %arg2, %c0_i32 : i32
    %1 = arith.extui %0 : i1 to i32
    %c0_i32_0 = arith.constant 0 : i32
    %2 = arith.cmpi ne, %1, %c0_i32_0 : i32
    scf.if %2 {
      %cst_10 = arith.constant 0.000000e+00 : f32
      %14 = vector.broadcast %cst_10 : f32 to vector<32x128xf32>
      %c0_11 = arith.constant 0 : index
      %c0_12 = arith.constant 0 : index
      %15 = vector.load %arg9[%c0_11, %c0_12] : memref<32x128xf32, #tpu.memory_space<vmem>>, vector<32x128xf32>
      tpu.vector_store %arg9[%c0_11, %c0_12], %14 {strides = array<i32>} : memref<32x128xf32, #tpu.memory_space<vmem>>, vector<32x128xf32>,
    } else {
    }
    %c0 = arith.constant 0 : index
    %c0_1 = arith.constant 0 : index
    %3 = vector.load %arg3[%c0, %c0_1] : memref<32x128xf8E4M3FN, #tpu.memory_space<vmem>>, vector<32x128xf8E4M3FN>
    %4 = arith.extf %3 : vector<32x128xf8E4M3FN> to vector<32x128xbf16>
    %c0_2 = arith.constant 0 : index
    %c0_3 = arith.constant 0 : index
    %5 = vector.load %arg5[%c0_2, %c0_3] : memref<128x128xf8E4M3FN, #tpu.memory_space<vmem>>, vector<128x128xf8E4M3FN>
    %6 = arith.extf %5 : vector<128x128xf8E4M3FN> to vector<128x128xbf16>
    %c0_4 = arith.constant 0 : index
    %c0_5 = arith.constant 0 : index
    %7 = vector.load %arg9[%c0_4, %c0_5] : memref<32x128xf32, #tpu.memory_space<vmem>>, vector<32x128xf32>
    %cst = arith.constant dense<0.000000e+00> : vector<32x128xf32>
    %8 = tpu.matmul %4, %6, %cst {dimension_numbers = #tpu.dot_dimension_numbers<[1], [0], [0], [1], [0, 0, 1, 1], [], []>} : vector<32x128xbf16>, vector<128x128xbf16>, vector<32x128xf32> -> vector<32x128xf32>
    %9 = arith.addf %7, %8 : vector<32x128xf32>
    %c0_6 = arith.constant 0 : index
    %c0_7 = arith.constant 0 : index
    %10 = vector.load %arg9[%c0_6, %c0_7] : memref<32x128xf32, #tpu.memory_space<vmem>>, vector<32x128xf32>
    tpu.vector_store %arg9[%c0_6, %c0_7], %9 {strides = array<i32>} : memref<32x128xf32, #tpu.memory_space<vmem>>, vector<32x128xf32>,
    %c0_i32_8 = arith.constant 0 : i32
    %11 = arith.cmpi eq, %arg2, %c0_i32_8 : i32
    %12 = arith.extui %11 : i1 to i32
    %c0_i32_9 = arith.constant 0 : i32
    %13 = arith.cmpi ne, %12, %c0_i32_9 : i32
    scf.if %13 {
      %c0_10 = arith.constant 0 : index
      %c0_11 = arith.constant 0 : index
      %14 = vector.load %arg9[%c0_10, %c0_11] : memref<32x128xf32, #tpu.memory_space<vmem>>, vector<32x128xf32>
      %c0_12 = arith.constant 0 : index
      %c0_13 = arith.constant 0 : index
      %15 = vector.load %arg4[%c0_12, %c0_13] : memref<32x1xf32, #tpu.memory_space<vmem>>, vector<32x1xf32>
      %16 = vector.broadcast %15 : vector<32x1xf32> to vector<32x128xf32>
      %17 = arith.mulf %14, %16 : vector<32x128xf32>
      %c0_14 = arith.constant 0 : index
      %c0_15 = arith.constant 0 : index
      %18 = vector.load %arg6[%c0_14, %c0_15] : memref<1x128xf32, #tpu.memory_space<vmem>>, vector<1x128xf32>
      %19 = vector.broadcast %18 : vector<1x128xf32> to vector<32x128xf32>
      %20 = arith.mulf %17, %19 : vector<32x128xf32>
      %c0_16 = arith.constant 0 : index
      %c0_17 = arith.constant 0 : index
      %21 = vector.load %arg7[%c0_16, %c0_17] : memref<1x128xf32, #tpu.memory_space<vmem>>, vector<1x128xf32>
      %22 = vector.broadcast %21 : vector<1x128xf32> to vector<32x128xf32>
      %23 = arith.addf %20, %22 : vector<32x128xf32>
      %24 = arith.truncf %23 : vector<32x128xf32> to vector<32x128xbf16>
      %c0_18 = arith.constant 0 : index
      %c0_19 = arith.constant 0 : index
      %25 = vector.load %arg8[%c0_18, %c0_19] : memref<32x128xbf16, #tpu.memory_space<vmem>>, vector<32x128xbf16>
      tpu.vector_store %arg8[%c0_18, %c0_19], %24 {strides = array<i32>} : memref<32x128xbf16, #tpu.memory_space<vmem>>, vector<32x128xbf16>,
    } else {
    }
    return
  }
  func.func @transform_0(%arg0: i32, %arg1: i32, %arg2: i32) -> (i32, i32) {
    %c0_i32 = arith.constant 0 : i32
    return %arg0, %arg2 : i32, i32
  }
  func.func @transform_1(%arg0: i32, %arg1: i32, %arg2: i32) -> (i32, i32) {
    %c0_i32 = arith.constant 0 : i32
    %c0_i32_0 = arith.constant 0 : i32
    return %arg0, %c0_i32 : i32, i32
  }
  func.func @transform_2(%arg0: i32, %arg1: i32, %arg2: i32) -> (i32, i32) {
    %c0_i32 = arith.constant 0 : i32
    return %arg2, %arg1 : i32, i32
  }
  func.func @transform_3(%arg0: i32, %arg1: i32, %arg2: i32) -> (i32, i32) {
    %c0_i32 = arith.constant 0 : i32
    %c0_i32_0 = arith.constant 0 : i32
    return %c0_i32, %arg1 : i32, i32
  }
  func.func @transform_4(%arg0: i32, %arg1: i32, %arg2: i32) -> (i32, i32) {
    %c0_i32 = arith.constant 0 : i32
    %c0_i32_0 = arith.constant 0 : i32
    return %c0_i32, %arg1 : i32, i32
  }
  func.func @transform_5(%arg0: i32, %arg1: i32, %arg2: i32) -> (i32, i32) {
    %c0_i32 = arith.constant 0 : i32
    return %arg0, %arg1 : i32, i32
  }
}

</mosaic_0001>

<llo_original>
// kernel: fp8_linear_prepared.2
$region0: #{fp8_linear_prepared.2}
  #allocation0 [shape = 'u32[]', space=smem, size = 0x4, offset = 0x4, fixed_abs, tag = 'smem constant byte address 0x4 - core index']
  #allocation1 [shape = 'u32[144,128]{1,0:T(1,128)}', space=vmem, size = 0x12000, scoped, tag = 'internal scratch']
  %s0 = inlined_call_operand.vmem [shape: bf16[32,128], index: 0, kind: input, shape index: {}]
  %s1 = inlined_call_operand.vmem [shape: f8e4m3fn[32,128], index: 1, kind: output, shape index: {0}]
  %s2 = inlined_call_operand.vmem [shape: f32[32,1], index: 2, kind: output, shape index: {1}]
  %3 = xla_tuple %s1, %s2
  %s4 = sld [smem:[#allocation0]]
  $region22: #{fp8_linear_prepared.2} parent=0
    _
  %s6 = ssub.s32 1, %s4
  %s7 = scalar_select 0, %s6, %s4
  // Predicated region
  $region2: #{fp8_linear_prepared.2} parent=0 // pred_check
    _
  $region3: #{fp8_linear_prepared.2} parent=0 // pred_check_branch
    %9 = sbr.rel (0) target = $region5
  $region4: #{fp8_linear_prepared.2} parent=0 // pred_region
    _
  $region5: #{fp8_linear_prepared.2} parent=0 // pred_fallthru
    _
  %v10 = vld [vmem:[%s0] sm:$0xf]
  %v11 = vld [vmem:[%s0 + $0x4] sm:$0xf]
  %v12 = vld [vmem:[%s0 + $0x8] sm:$0xf]
  %v13 = vld [vmem:[%s0 + $0xc] sm:$0xf]
  %v14 = vand.u32 2147450879, %v10
  %v15 = vand.u32 2147450879, %v11
  %v16 = vand.u32 2147450879, %v12
  %v17 = vand.u32 2147450879, %v13
  %v22 = vunpack.c.l.b16 %v14
  %v23 = vunpack.c.l.b16 %v15
  %v24 = vunpack.c.l.b16 %v16
  %v25 = vunpack.c.l.b16 %v17
  %v26 = vpack.c.b16 %v23, %v22
  %v27 = vpack.c.b16 %v25, %v24
  %30 = vmax.xlane.bf16.xlu0 %v26
  %v31 = vpop.xlane.xlu0 %30
  %32 = vmax.xlane.bf16.xlu0 %v27
  %v33 = vpop.xlane.xlu0 %32
  %v34 = vunpack.c.l.bf16 %v31
  %v35 = vunpack.c.h.bf16 %v31
  %v36 = vunpack.c.l.bf16 %v33
  %v37 = vunpack.c.h.bf16 %v33
  %vm38 = vcmp.gt.f32.partialorder %v34, 0.0
  %vm39 = vcmp.gt.f32.partialorder %v35, 0.0
  %vm40 = vcmp.gt.f32.partialorder %v36, 0.0
  %vm41 = vcmp.gt.f32.partialorder %v37, 0.0
  %v42 = vrcp.pop 448.0
  %v43 = vmul.f32 %v34, %v42
  %v44 = vmul.f32 %v35, %v42
  %v45 = vmul.f32 %v36, %v42
  %v46 = vmul.f32 %v37, %v42
  %v47 = vsel %vm38, %v43, 1.0
  %v48 = vsel %vm39, %v44, 1.0
  %v49 = vsel %vm40, %v45, 1.0
  %v50 = vsel %vm41, %v46, 1.0
  %v51 = vrcp.pop %v47
  %v52 = vmul.f32 1.0, %v51
  %v53 = vrcp.pop %v48
  %v54 = vmul.f32 1.0, %v53
  %v55 = vrcp.pop %v49
  %v56 = vmul.f32 1.0, %v55
  %v57 = vrcp.pop %v50
  %v58 = vmul.f32 1.0, %v57
  %v59 = vunpack.c.l.bf16 %v10
  %v60 = vunpack.c.l.bf16 %v11
  %v61 = vunpack.c.l.bf16 %v12
  %v62 = vunpack.c.l.bf16 %v13
  %v63 = vmul.f32 %v59, %v52
  %v64 = vmul.f32 %v60, %v54
  %v65 = vmul.f32 %v61, %v56
  %v66 = vmul.f32 %v62, %v58
  %v67 = vmax.f32 %v63, -448.0
  %v68 = vmax.f32 %v64, -448.0
  %v69 = vmax.f32 %v65, -448.0
  %v70 = vmax.f32 %v66, -448.0
  %v71 = vmin.f32 %v67, 448.0
  %v72 = vmin.f32 %v68, 448.0
  %v73 = vmin.f32 %v69, 448.0
  %v74 = vmin.f32 %v70, 448.0
  %v75 = vand.u32 2147483647, %v71
  %v76 = vand.u32 %v71, 2147483648
  %v78 = vadd.f32 1182793728, %v75
  %v80 = vsub.s32 %v78, 1182793728
  %v81 = vshrl.u32 %v71, 20
  %v82 = vand.u32 %v81, 1
  %v83 = vadd.s32 %v75, 3288858623
  %v84 = vadd.s32 %v83, %v82
  %v85 = vshrl.u32 %v84, 20
  %vm86 = vcmp.lt.s32.totalorder %v75, 1015021568
  %v87 = vsel %vm86, %v80, %v85
  %vm88 = vcmp.ge.s32.totalorder %v75, 1139277825
  %v89 = vsel %vm88, 127, %v87
  %vm90 = vcmp.ne.f32.partialorder %v71, %v71
  %v91 = vsel %vm90, 127, %v89
  %v92 = vshrl.u32 %v76, 24
  %v93 = vor.u32 %v91, %v92
  %v94 = vor.u32 %v93, 4294967040
  %v96 = vand.u32 2147483647, %v72
  %v97 = vand.u32 %v72, 2147483648
  %v99 = vadd.f32 1182793728, %v96
  %v101 = vsub.s32 %v99, 1182793728
  %v102 = vshrl.u32 %v72, 20
  %v103 = vand.u32 %v102, 1
  %v104 = vadd.s32 %v96, 3288858623
  %v105 = vadd.s32 %v104, %v103
  %v106 = vshrl.u32 %v105, 20
  %vm107 = vcmp.lt.s32.totalorder %v96, 1015021568
  %v108 = vsel %vm107, %v101, %v106
  %vm109 = vcmp.ge.s32.totalorder %v96, 1139277825
  %v110 = vsel %vm109, 127, %v108
  %vm111 = vcmp.ne.f32.partialorder %v72, %v72
  %v112 = vsel %vm111, 127, %v110
  %v113 = vshrl.u32 %v97, 24
  %v114 = vor.u32 %v112, %v113
  %v115 = vor.u32 %v114, 4294967040
  %v117 = vand.u32 2147483647, %v73
  %v118 = vand.u32 %v73, 2147483648
  %v120 = vadd.f32 1182793728, %v117
  %v122 = vsub.s32 %v120, 1182793728
  %v123 = vshrl.u32 %v73, 20
  %v124 = vand.u32 %v123, 1
  %v125 = vadd.s32 %v117, 3288858623
  %v126 = vadd.s32 %v125, %v124
  %v127 = vshrl.u32 %v126, 20
  %vm128 = vcmp.lt.s32.totalorder %v117, 1015021568
  %v129 = vsel %vm128, %v122, %v127
  %vm130 = vcmp.ge.s32.totalorder %v117, 1139277825
  %v131 = vsel %vm130, 127, %v129
  %vm132 = vcmp.ne.f32.partialorder %v73, %v73
  %v133 = vsel %vm132, 127, %v131
  %v134 = vshrl.u32 %v118, 24
  %v135 = vor.u32 %v133, %v134
  %v136 = vor.u32 %v135, 4294967040
  %v138 = vand.u32 2147483647, %v74
  %v139 = vand.u32 %v74, 2147483648
  %v141 = vadd.f32 1182793728, %v138
  %v143 = vsub.s32 %v141, 1182793728
  %v144 = vshrl.u32 %v74, 20
  %v145 = vand.u32 %v144, 1
  %v146 = vadd.s32 %v138, 3288858623
  %v147 = vadd.s32 %v146, %v145
  %v148 = vshrl.u32 %v147, 20
  %vm149 = vcmp.lt.s32.totalorder %v138, 1015021568
  %v150 = vsel %vm149, %v143, %v148
  %vm151 = vcmp.ge.s32.totalorder %v138, 1139277825
  %v152 = vsel %vm151, 127, %v150
  %vm153 = vcmp.ne.f32.partialorder %v74, %v74
  %v154 = vsel %vm153, 127, %v152
  %v155 = vshrl.u32 %v139, 24
  %v156 = vor.u32 %v154, %v155
  %v157 = vor.u32 %v156, 4294967040
  %v159 = vpack.c.b16 %v115, %v94
  %v160 = vpack.c.b16 %v157, %v136
  %v161 = vpack.c.b8 %v160, %v159
  %163 = vst [vmem:[%s1] sm:$0xff] %v161
  %vm164 = vcmask 7168
  %165 = vst.msk [vmem:[%s2] sm:$0xff] %vm164, %v47
  %166 = vst.msk [vmem:[%s2 + $0x8] sm:$0xff] %vm164, %v48
  %167 = vst.msk [vmem:[%s2 + $0x10] sm:$0xff] %vm164, %v49
  %168 = vst.msk [vmem:[%s2 + $0x18] sm:$0xff] %vm164, %v50
  // Predicated region
  $region6: #{fp8_linear_prepared.2} parent=0 // pred_check
    _
  $region7: #{fp8_linear_prepared.2} parent=0 // pred_check_branch
    %170 = sbr.rel (0) target = $region9
  $region8: #{fp8_linear_prepared.2} parent=0 // pred_region
    _
  $region9: #{fp8_linear_prepared.2} parent=0 // pred_fallthru
    _
  // Predicated region
  $region10: #{fp8_linear_prepared.2} parent=0 // pred_check
    _
  $region11: #{fp8_linear_prepared.2} parent=0 // pred_check_branch
    %172 = sbr.rel (0) target = $region13
  $region12: #{fp8_linear_prepared.2} parent=0 // pred_region
    _
  $region13: #{fp8_linear_prepared.2} parent=0 // pred_fallthru
    _
  // Predicated region
  $region14: #{fp8_linear_prepared.2} parent=0 // pred_check
    _
  $region15: #{fp8_linear_prepared.2} parent=0 // pred_check_branch
    %174 = sbr.rel (0) target = $region17
  $region16: #{fp8_linear_prepared.2} parent=0 // pred_region
    _
  $region17: #{fp8_linear_prepared.2} parent=0 // pred_fallthru
    _
  // Predicated region
  $region18: #{fp8_linear_prepared.2} parent=0 // pred_check
    _
  $region19: #{fp8_linear_prepared.2} parent=0 // pred_check_branch
    %176 = sbr.rel (0) target = $region21
  $region20: #{fp8_linear_prepared.2} parent=0 // pred_region
    _
  $region21: #{fp8_linear_prepared.2} parent=0 // pred_fallthru
    _

// kernel: fp8_linear_prepared.3
$region0: #{fp8_linear_prepared.3}
  #allocation0 [shape = 'u32[]', space=smem, size = 0x4, offset = 0x4, fixed_abs, tag = 'smem constant byte address 0x4 - core index']
  #allocation1 [shape = 'u32[144,128]{1,0:T(1,128)}', space=vmem, size = 0x12000, scoped, tag = 'internal scratch']
  #allocation2 [shape = 'f32[32,128]{1,0:T(8,128)}', space=vmem, size = 0x4000, scoped, tag = 'scratch operand']
  %s0 = inlined_call_operand.vmem [shape: f8e4m3fn[32,128], index: 0, kind: input, shape index: {}]
  %s1 = inlined_call_operand.vmem [shape: f32[32,1], index: 1, kind: input, shape index: {}]
  %s2 = inlined_call_operand.vmem [shape: f8e4m3fn[128,128], index: 2, kind: input, shape index: {}]
  %s3 = inlined_call_operand.vmem [shape: f32[1,128], index: 3, kind: input, shape index: {}]
  %s4 = inlined_call_operand.vmem [shape: f32[1,128], index: 4, kind: input, shape index: {}]
  %s5 = inlined_call_operand.vmem [shape: bf16[32,128], index: 5, kind: output, shape index: {}]
  %s6 = sld [smem:[#allocation0]]
  $region58: #{fp8_linear_prepared.3} parent=0
    _
  %s8 = ssub.s32 1, %s6
  %s9 = scalar_select 0, %s8, %s6
  // Predicated region
  $region2: #{fp8_linear_prepared.3} parent=0 // pred_check
    _
  $region3: #{fp8_linear_prepared.3} parent=0 // pred_check_branch
    %11 = sbr.rel (0) target = $region5
  $region4: #{fp8_linear_prepared.3} parent=0 // pred_region
    _
  $region5: #{fp8_linear_prepared.3} parent=0 // pred_fallthru
    _
  // Predicated region
  $region6: #{fp8_linear_prepared.3} parent=0 // pred_check
    _
  $region7: #{fp8_linear_prepared.3} parent=0 // pred_check_branch
    %13 = sbr.rel (0) target = $region9
  $region8: #{fp8_linear_prepared.3} parent=0 // pred_region
    _
  $region9: #{fp8_linear_prepared.3} parent=0 // pred_fallthru
    _
  // Predicated region
  $region10: #{fp8_linear_prepared.3} parent=0 // pred_check
    _
  $region11: #{fp8_linear_prepared.3} parent=0 // pred_check_branch
    %15 = sbr.rel (0) target = $region13
  $region12: #{fp8_linear_prepared.3} parent=0 // pred_region
    _
  $region13: #{fp8_linear_prepared.3} parent=0 // pred_fallthru
    _
  // Predicated region
  $region14: #{fp8_linear_prepared.3} parent=0 // pred_check
    _
  $region15: #{fp8_linear_prepared.3} parent=0 // pred_check_branch
    %17 = sbr.rel (0) target = $region17
  $region16: #{fp8_linear_prepared.3} parent=0 // pred_region
    _
  $region17: #{fp8_linear_prepared.3} parent=0 // pred_fallthru
    _
  // Predicated region
  $region18: #{fp8_linear_prepared.3} parent=0 // pred_check
    _
  $region19: #{fp8_linear_prepared.3} parent=0 // pred_check_branch
    %19 = sbr.rel (0) target = $region21
  $region20: #{fp8_linear_prepared.3} parent=0 // pred_region
    _
  $region21: #{fp8_linear_prepared.3} parent=0 // pred_fallthru
    _
  %p21 = scmp.eq.s32.totalorder 0, 0
  // Predicated region
  $region22: #{fp8_linear_prepared.3} parent=0 // pred_check
    %p22 = pneg %p21
  $region23: #{fp8_linear_prepared.3} parent=0 // pred_check_branch
    %24 = sbr.rel (%p22) target = $region25
  $region24: #{fp8_linear_prepared.3} parent=0 // pred_region
    %25 = vst [vmem:[#allocation2] sm:$0xff] 0.0
    %26 = vst [vmem:[#allocation2 + $0x8] sm:$0xff] 0.0
    %27 = vst [vmem:[#allocation2 + $0x10] sm:$0xff] 0.0
    %28 = vst [vmem:[#allocation2 + $0x18] sm:$0xff] 0.0
  $region25: #{fp8_linear_prepared.3} parent=0 // pred_fallthru
    _
  %v29 = vld [vmem:[%s0] sm:$0xff]
  $region26: #{fp8_linear_prepared.3} parent=0
    #allocation3 [shape = 'u8[4096]{0}', space=vmem, size = 0x1000, scoped, tag = 'scoped memory for fp8_linear_prepared.3']
    %30 = vst [vmem:[#allocation3] sm:$0xff] %v29
    %v31 = vld [vmem:[#allocation3] sm:$0x3]
    %v32 = vunpack.c.0.f8e4m3b11 %v31
    %v33 = vunpack.c.1.f8e4m3b11 %v31
    %v34 = vunpack.c.2.f8e4m3b11 %v31
    %v35 = vunpack.c.3.f8e4m3b11 %v31
    %v36 = vand.u32 2147483647, %v32
    %vm37 = vcmp.gt.f32.partialorder %v36, 29.0
    %vm38 = vcmp.ne.f32.partialorder %v32, %v32
    %v39 = vmul.f32 %v32, 16.0
    %v40 = vsel %vm38, -0.0, %v39
    %v41 = vsel %vm37, nan, %v40
    %v42 = vand.u32 2147483647, %v33
    %vm43 = vcmp.gt.f32.partialorder %v42, 29.0
    %vm44 = vcmp.ne.f32.partialorder %v33, %v33
    %v45 = vmul.f32 %v33, 16.0
    %v46 = vsel %vm44, -0.0, %v45
    %v47 = vsel %vm43, nan, %v46
    %v48 = vand.u32 2147483647, %v34
    %vm49 = vcmp.gt.f32.partialorder %v48, 29.0
    %vm50 = vcmp.ne.f32.partialorder %v34, %v34
    %v51 = vmul.f32 %v34, 16.0
    %v52 = vsel %vm50, -0.0, %v51
    %v53 = vsel %vm49, nan, %v52
    %v54 = vand.u32 2147483647, %v35
    %vm55 = vcmp.gt.f32.partialorder %v54, 29.0
    %vm56 = vcmp.ne.f32.partialorder %v35, %v35
    %v57 = vmul.f32 %v35, 16.0
    %v58 = vsel %vm56, -0.0, %v57
    %v59 = vsel %vm55, nan, %v58
  $region27: #{fp8_linear_prepared.3} parent=0
    #allocation4 [shape = 'u8[4096]{0}', space=vmem, size = 0x1000, scoped, tag = 'scoped memory for fp8_linear_prepared.3']
    %60 = vst [vmem:[#allocation4] sm:$0xff] %v29
    %s61 = scalar_lea.vmem [#allocation4], 2
    %v62 = vld [vmem:[%s61] sm:$0x3]
    %v63 = vunpack.c.0.f8e4m3b11 %v62
    %v64 = vunpack.c.1.f8e4m3b11 %v62
    %v65 = vunpack.c.2.f8e4m3b11 %v62
    %v66 = vunpack.c.3.f8e4m3b11 %v62
    %v67 = vand.u32 2147483647, %v63
    %vm68 = vcmp.gt.f32.partialorder %v67, 29.0
    %vm69 = vcmp.ne.f32.partialorder %v63, %v63
    %v70 = vmul.f32 %v63, 16.0
    %v71 = vsel %vm69, -0.0, %v70
    %v72 = vsel %vm68, nan, %v71
    %v73 = vand.u32 2147483647, %v64
    %vm74 = vcmp.gt.f32.partialorder %v73, 29.0
    %vm75 = vcmp.ne.f32.partialorder %v64, %v64
    %v76 = vmul.f32 %v64, 16.0
    %v77 = vsel %vm75, -0.0, %v76
    %v78 = vsel %vm74, nan, %v77
    %v79 = vand.u32 2147483647, %v65
    %vm80 = vcmp.gt.f32.partialorder %v79, 29.0
    %vm81 = vcmp.ne.f32.partialorder %v65, %v65
    %v82 = vmul.f32 %v65, 16.0
    %v83 = vsel %vm81, -0.0, %v82
    %v84 = vsel %vm80, nan, %v83
    %v85 = vand.u32 2147483647, %v66
    %vm86 = vcmp.gt.f32.partialorder %v85, 29.0
    %vm87 = vcmp.ne.f32.partialorder %v66, %v66
    %v88 = vmul.f32 %v66, 16.0
    %v89 = vsel %vm87, -0.0, %v88
    %v90 = vsel %vm86, nan, %v89
  $region28: #{fp8_linear_prepared.3} parent=0
    #allocation5 [shape = 'u8[4096]{0}', space=vmem, size = 0x1000, scoped, tag = 'scoped memory for fp8_linear_prepared.3']
    %91 = vst [vmem:[#allocation5] sm:$0xff] %v29
    %s92 = scalar_lea.vmem [#allocation5], 4
    %v93 = vld [vmem:[%s92] sm:$0x3]
    %v94 = vunpack.c.0.f8e4m3b11 %v93
    %v95 = vunpack.c.1.f8e4m3b11 %v93
    %v96 = vunpack.c.2.f8e4m3b11 %v93
    %v97 = vunpack.c.3.f8e4m3b11 %v93
    %v98 = vand.u32 2147483647, %v94
    %vm99 = vcmp.gt.f32.partialorder %v98, 29.0
    %vm100 = vcmp.ne.f32.partialorder %v94, %v94
    %v101 = vmul.f32 %v94, 16.0
    %v102 = vsel %vm100, -0.0, %v101
    %v103 = vsel %vm99, nan, %v102
    %v104 = vand.u32 2147483647, %v95
    %vm105 = vcmp.gt.f32.partialorder %v104, 29.0
    %vm106 = vcmp.ne.f32.partialorder %v95, %v95
    %v107 = vmul.f32 %v95, 16.0
    %v108 = vsel %vm106, -0.0, %v107
    %v109 = vsel %vm105, nan, %v108
    %v110 = vand.u32 2147483647, %v96
    %vm111 = vcmp.gt.f32.partialorder %v110, 29.0
    %vm112 = vcmp.ne.f32.partialorder %v96, %v96
    %v113 = vmul.f32 %v96, 16.0
    %v114 = vsel %vm112, -0.0, %v113
    %v115 = vsel %vm111, nan, %v114
    %v116 = vand.u32 2147483647, %v97
    %vm117 = vcmp.gt.f32.partialorder %v116, 29.0
    %vm118 = vcmp.ne.f32.partialorder %v97, %v97
    %v119 = vmul.f32 %v97, 16.0
    %v120 = vsel %vm118, -0.0, %v119
    %v121 = vsel %vm117, nan, %v120
  $region29: #{fp8_linear_prepared.3} parent=0
    #allocation6 [shape = 'u8[4096]{0}', space=vmem, size = 0x1000, scoped, tag = 'scoped memory for fp8_linear_prepared.3']
    %122 = vst [vmem:[#allocation6] sm:$0xff] %v29
    %s123 = scalar_lea.vmem [#allocation6], 6
    %v124 = vld [vmem:[%s123] sm:$0x3]
    %v125 = vunpack.c.0.f8e4m3b11 %v124
    %v126 = vunpack.c.1.f8e4m3b11 %v124
    %v127 = vunpack.c.2.f8e4m3b11 %v124
    %v128 = vunpack.c.3.f8e4m3b11 %v124
    %v129 = vand.u32 2147483647, %v125
    %vm130 = vcmp.gt.f32.partialorder %v129, 29.0
    %vm131 = vcmp.ne.f32.partialorder %v125, %v125
    %v132 = vmul.f32 %v125, 16.0
    %v133 = vsel %vm131, -0.0, %v132
    %v134 = vsel %vm130, nan, %v133
    %v135 = vand.u32 2147483647, %v126
    %vm136 = vcmp.gt.f32.partialorder %v135, 29.0
    %vm137 = vcmp.ne.f32.partialorder %v126, %v126
    %v138 = vmul.f32 %v126, 16.0
    %v139 = vsel %vm137, -0.0, %v138
    %v140 = vsel %vm136, nan, %v139
    %v141 = vand.u32 2147483647, %v127
    %vm142 = vcmp.gt.f32.partialorder %v141, 29.0
    %vm143 = vcmp.ne.f32.partialorder %v127, %v127
    %v144 = vmul.f32 %v127, 16.0
    %v145 = vsel %vm143, -0.0, %v144
    %v146 = vsel %vm142, nan, %v145
    %v147 = vand.u32 2147483647, %v128
    %vm148 = vcmp.gt.f32.partialorder %v147, 29.0
    %vm149 = vcmp.ne.f32.partialorder %v128, %v128
    %v150 = vmul.f32 %v128, 16.0
    %v151 = vsel %vm149, -0.0, %v150
    %v152 = vsel %vm148, nan, %v151
  %v153 = vpack.c.bf16 %v72, %v41
  %v154 = vpack.c.bf16 %v134, %v103
  %v155 = vld [vmem:[%s2] sm:$0xff]
  %v156 = vld [vmem:[%s2 + $0x8] sm:$0xff]
  %v157 = vld [vmem:[%s2 + $0x10] sm:$0xff]
  %v158 = vld [vmem:[%s2 + $0x18] sm:$0xff]
  $region30: #{fp8_linear_prepared.3} parent=0
    #allocation7 [shape = 'u8[4096]{0}', space=vmem, size = 0x1000, scoped, tag = 'scoped memory for fp8_linear_prepared.3']
    %159 = vst [vmem:[#allocation7] sm:$0xff] %v155
    %v160 = vld [vmem:[#allocation7] sm:$0x3]
    %v161 = vunpack.c.0.f8e4m3b11 %v160
    %v162 = vunpack.c.1.f8e4m3b11 %v160
    %v163 = vunpack.c.2.f8e4m3b11 %v160
    %v164 = vunpack.c.3.f8e4m3b11 %v160
    %v165 = vand.u32 2147483647, %v161
    %vm166 = vcmp.gt.f32.partialorder %v165, 29.0
    %vm167 = vcmp.ne.f32.partialorder %v161, %v161
    %v168 = vmul.f32 %v161, 16.0
    %v169 = vsel %vm167, -0.0, %v168
    %v170 = vsel %vm166, nan, %v169
    %v171 = vand.u32 2147483647, %v162
    %vm172 = vcmp.gt.f32.partialorder %v171, 29.0
    %vm173 = vcmp.ne.f32.partialorder %v162, %v162
    %v174 = vmul.f32 %v162, 16.0
    %v175 = vsel %vm173, -0.0, %v174
    %v176 = vsel %vm172, nan, %v175
    %v177 = vand.u32 2147483647, %v163
    %vm178 = vcmp.gt.f32.partialorder %v177, 29.0
    %vm179 = vcmp.ne.f32.partialorder %v163, %v163
    %v180 = vmul.f32 %v163, 16.0
    %v181 = vsel %vm179, -0.0, %v180
    %v182 = vsel %vm178, nan, %v181
    %v183 = vand.u32 2147483647, %v164
    %vm184 = vcmp.gt.f32.partialorder %v183, 29.0
    %vm185 = vcmp.ne.f32.partialorder %v164, %v164
    %v186 = vmul.f32 %v164, 16.0
    %v187 = vsel %vm185, -0.0, %v186
    %v188 = vsel %vm184, nan, %v187
  $region31: #{fp8_linear_prepared.3} parent=0
    #allocation8 [shape = 'u8[4096]{0}', space=vmem, size = 0x1000, scoped, tag = 'scoped memory for fp8_linear_prepared.3']
    %189 = vst [vmem:[#allocation8] sm:$0xff] %v155
    %s190 = scalar_lea.vmem [#allocation8], 2
    %v191 = vld [vmem:[%s190] sm:$0x3]
    %v192 = vunpack.c.0.f8e4m3b11 %v191
    %v193 = vunpack.c.1.f8e4m3b11 %v191
    %v194 = vunpack.c.2.f8e4m3b11 %v191
    %v195 = vunpack.c.3.f8e4m3b11 %v191
    %v196 = vand.u32 2147483647, %v192
    %vm197 = vcmp.gt.f32.partialorder %v196, 29.0
    %vm198 = vcmp.ne.f32.partialorder %v192, %v192
    %v199 = vmul.f32 %v192, 16.0
    %v200 = vsel %vm198, -0.0, %v199
    %v201 = vsel %vm197, nan, %v200
    %v202 = vand.u32 2147483647, %v193
    %vm203 = vcmp.gt.f32.partialorder %v202, 29.0
    %vm204 = vcmp.ne.f32.partialorder %v193, %v193
    %v205 = vmul.f32 %v193, 16.0
    %v206 = vsel %vm204, -0.0, %v205
    %v207 = vsel %vm203, nan, %v206
    %v208 = vand.u32 2147483647, %v194
    %vm209 = vcmp.gt.f32.partialorder %v208, 29.0
    %vm210 = vcmp.ne.f32.partialorder %v194, %v194
    %v211 = vmul.f32 %v194, 16.0
    %v212 = vsel %vm210, -0.0, %v211
    %v213 = vsel %vm209, nan, %v212
    %v214 = vand.u32 2147483647, %v195
    %vm215 = vcmp.gt.f32.partialorder %v214, 29.0
    %vm216 = vcmp.ne.f32.partialorder %v195, %v195
    %v217 = vmul.f32 %v195, 16.0
    %v218 = vsel %vm216, -0.0, %v217
    %v219 = vsel %vm215, nan, %v218
  $region32: #{fp8_linear_prepared.3} parent=0
    #allocation9 [shape = 'u8[4096]{0}', space=vmem, size = 0x1000, scoped, tag = 'scoped memory for fp8_linear_prepared.3']
    %220 = vst [vmem:[#allocation9] sm:$0xff] %v155
    %s221 = scalar_lea.vmem [#allocation9], 4
    %v222 = vld [vmem:[%s221] sm:$0x3]
    %v223 = vunpack.c.0.f8e4m3b11 %v222
    %v224 = vunpack.c.1.f8e4m3b11 %v222
    %v225 = vunpack.c.2.f8e4m3b11 %v222
    %v226 = vunpack.c.3.f8e4m3b11 %v222
    %v227 = vand.u32 2147483647, %v223
    %vm228 = vcmp.gt.f32.partialorder %v227, 29.0
    %vm229 = vcmp.ne.f32.partialorder %v223, %v223
    %v230 = vmul.f32 %v223, 16.0
    %v231 = vsel %vm229, -0.0, %v230
    %v232 = vsel %vm228, nan, %v231
    %v233 = vand.u32 2147483647, %v224
    %vm234 = vcmp.gt.f32.partialorder %v233, 29.0
    %vm235 = vcmp.ne.f32.partialorder %v224, %v224
    %v236 = vmul.f32 %v224, 16.0
    %v237 = vsel %vm235, -0.0, %v236
    %v238 = vsel %vm234, nan, %v237
    %v239 = vand.u32 2147483647, %v225
    %vm240 = vcmp.gt.f32.partialorder %v239, 29.0
    %vm241 = vcmp.ne.f32.partialorder %v225, %v225
    %v242 = vmul.f32 %v225, 16.0
    %v243 = vsel %vm241, -0.0, %v242
    %v244 = vsel %vm240, nan, %v243
    %v245 = vand.u32 2147483647, %v226
    %vm246 = vcmp.gt.f32.partialorder %v245, 29.0
    %vm247 = vcmp.ne.f32.partialorder %v226, %v226
    %v248 = vmul.f32 %v226, 16.0
    %v249 = vsel %vm247, -0.0, %v248
    %v250 = vsel %vm246, nan, %v249
  $region33: #{fp8_linear_prepared.3} parent=0
    #allocation10 [shape = 'u8[4096]{0}', space=vmem, size = 0x1000, scoped, tag = 'scoped memory for fp8_linear_prepared.3']
    %251 = vst [vmem:[#allocation10] sm:$0xff] %v155
    %s252 = scalar_lea.vmem [#allocation10], 6
    %v253 = vld [vmem:[%s252] sm:$0x3]
    %v254 = vunpack.c.0.f8e4m3b11 %v253
    %v255 = vunpack.c.1.f8e4m3b11 %v253
    %v256 = vunpack.c.2.f8e4m3b11 %v253
    %v257 = vunpack.c.3.f8e4m3b11 %v253
    %v258 = vand.u32 2147483647, %v254
    %vm259 = vcmp.gt.f32.partialorder %v258, 29.0
    %vm260 = vcmp.ne.f32.partialorder %v254, %v254
    %v261 = vmul.f32 %v254, 16.0
    %v262 = vsel %vm260, -0.0, %v261
    %v263 = vsel %vm259, nan, %v262
    %v264 = vand.u32 2147483647, %v255
    %vm265 = vcmp.gt.f32.partialorder %v264, 29.0
    %vm266 = vcmp.ne.f32.partialorder %v255, %v255
    %v267 = vmul.f32 %v255, 16.0
    %v268 = vsel %vm266, -0.0, %v267
    %v269 = vsel %vm265, nan, %v268
    %v270 = vand.u32 2147483647, %v256
    %vm271 = vcmp.gt.f32.partialorder %v270, 29.0
    %vm272 = vcmp.ne.f32.partialorder %v256, %v256
    %v273 = vmul.f32 %v256, 16.0
    %v274 = vsel %vm272, -0.0, %v273
    %v275 = vsel %vm271, nan, %v274
    %v276 = vand.u32 2147483647, %v257
    %vm277 = vcmp.gt.f32.partialorder %v276, 29.0
    %vm278 = vcmp.ne.f32.partialorder %v257, %v257
    %v279 = vmul.f32 %v257, 16.0
    %v280 = vsel %vm278, -0.0, %v279
    %v281 = vsel %vm277, nan, %v280
  $region34: #{fp8_linear_prepared.3} parent=0
    #allocation11 [shape = 'u8[4096]{0}', space=vmem, size = 0x1000, scoped, tag = 'scoped memory for fp8_linear_prepared.3']
    %282 = vst [vmem:[#allocation11] sm:$0xff] %v156
    %v283 = vld [vmem:[#allocation11] sm:$0x3]
    %v284 = vunpack.c.0.f8e4m3b11 %v283
    %v285 = vunpack.c.1.f8e4m3b11 %v283
    %v286 = vunpack.c.2.f8e4m3b11 %v283
    %v287 = vunpack.c.3.f8e4m3b11 %v283
    %v288 = vand.u32 2147483647, %v284
    %vm289 = vcmp.gt.f32.partialorder %v288, 29.0
    %vm290 = vcmp.ne.f32.partialorder %v284, %v284
    %v291 = vmul.f32 %v284, 16.0
    %v292 = vsel %vm290, -0.0, %v291
    %v293 = vsel %vm289, nan, %v292
    %v294 = vand.u32 2147483647, %v285
    %vm295 = vcmp.gt.f32.partialorder %v294, 29.0
    %vm296 = vcmp.ne.f32.partialorder %v285, %v285
    %v297 = vmul.f32 %v285, 16.0
    %v298 = vsel %vm296, -0.0, %v297
    %v299 = vsel %vm295, nan, %v298
    %v300 = vand.u32 2147483647, %v286
    %vm301 = vcmp.gt.f32.partialorder %v300, 29.0
    %vm302 = vcmp.ne.f32.partialorder %v286, %v286
    %v303 = vmul.f32 %v286, 16.0
    %v304 = vsel %vm302, -0.0, %v303
    %v305 = vsel %vm301, nan, %v304
    %v306 = vand.u32 2147483647, %v287
    %vm307 = vcmp.gt.f32.partialorder %v306, 29.0
    %vm308 = vcmp.ne.f32.partialorder %v287, %v287
    %v309 = vmul.f32 %v287, 16.0
    %v310 = vsel %vm308, -0.0, %v309
    %v311 = vsel %vm307, nan, %v310
  $region35: #{fp8_linear_prepared.3} parent=0
    #allocation12 [shape = 'u8[4096]{0}', space=vmem, size = 0x1000, scoped, tag = 'scoped memory for fp8_linear_prepared.3']
    %312 = vst [vmem:[#allocation12] sm:$0xff] %v156
    %s313 = scalar_lea.vmem [#allocation12], 2
    %v314 = vld [vmem:[%s313] sm:$0x3]
    %v315 = vunpack.c.0.f8e4m3b11 %v314
    %v316 = vunpack.c.1.f8e4m3b11 %v314
    %v317 = vunpack.c.2.f8e4m3b11 %v314
    %v318 = vunpack.c.3.f8e4m3b11 %v314
    %v319 = vand.u32 2147483647, %v315
    %vm320 = vcmp.gt.f32.partialorder %v319, 29.0
    %vm321 = vcmp.ne.f32.partialorder %v315, %v315
    %v322 = vmul.f32 %v315, 16.0
    %v323 = vsel %vm321, -0.0, %v322
    %v324 = vsel %vm320, nan, %v323
    %v325 = vand.u32 2147483647, %v316
    %vm326 = vcmp.gt.f32.partialorder %v325, 29.0
    %vm327 = vcmp.ne.f32.partialorder %v316, %v316
    %v328 = vmul.f32 %v316, 16.0
    %v329 = vsel %vm327, -0.0, %v328
    %v330 = vsel %vm326, nan, %v329
    %v331 = vand.u32 2147483647, %v317
    %vm332 = vcmp.gt.f32.partialorder %v331, 29.0
    %vm333 = vcmp.ne.f32.partialorder %v317, %v317
    %v334 = vmul.f32 %v317, 16.0
    %v335 = vsel %vm333, -0.0, %v334
    %v336 = vsel %vm332, nan, %v335
    %v337 = vand.u32 2147483647, %v318
    %vm338 = vcmp.gt.f32.partialorder %v337, 29.0
    %vm339 = vcmp.ne.f32.partialorder %v318, %v318
    %v340 = vmul.f32 %v318, 16.0
    %v341 = vsel %vm339, -0.0, %v340
    %v342 = vsel %vm338, nan, %v341
  $region36: #{fp8_linear_prepared.3} parent=0
    #allocation13 [shape = 'u8[4096]{0}', space=vmem, size = 0x1000, scoped, tag = 'scoped memory for fp8_linear_prepared.3']
    %343 = vst [vmem:[#allocation13] sm:$0xff] %v156
    %s344 = scalar_lea.vmem [#allocation13], 4
    %v345 = vld [vmem:[%s344] sm:$0x3]
    %v346 = vunpack.c.0.f8e4m3b11 %v345
    %v347 = vunpack.c.1.f8e4m3b11 %v345
    %v348 = vunpack.c.2.f8e4m3b11 %v345
    %v349 = vunpack.c.3.f8e4m3b11 %v345
    %v350 = vand.u32 2147483647, %v346
    %vm351 = vcmp.gt.f32.partialorder %v350, 29.0
    %vm352 = vcmp.ne.f32.partialorder %v346, %v346
    %v353 = vmul.f32 %v346, 16.0
    %v354 = vsel %vm352, -0.0, %v353
    %v355 = vsel %vm351, nan, %v354
    %v356 = vand.u32 2147483647, %v347
    %vm357 = vcmp.gt.f32.partialorder %v356, 29.0
    %vm358 = vcmp.ne.f32.partialorder %v347, %v347
    %v359 = vmul.f32 %v347, 16.0
    %v360 = vsel %vm358, -0.0, %v359
    %v361 = vsel %vm357, nan, %v360
    %v362 = vand.u32 2147483647, %v348
    %vm363 = vcmp.gt.f32.partialorder %v362, 29.0
    %vm364 = vcmp.ne.f32.partialorder %v348, %v348
    %v365 = vmul.f32 %v348, 16.0
    %v366 = vsel %vm364, -0.0, %v365
    %v367 = vsel %vm363, nan, %v366
    %v368 = vand.u32 2147483647, %v349
    %vm369 = vcmp.gt.f32.partialorder %v368, 29.0
    %vm370 = vcmp.ne.f32.partialorder %v349, %v349
    %v371 = vmul.f32 %v349, 16.0
    %v372 = vsel %vm370, -0.0, %v371
    %v373 = vsel %vm369, nan, %v372
  $region37: #{fp8_linear_prepared.3} parent=0
    #allocation14 [shape = 'u8[4096]{0}', space=vmem, size = 0x1000, scoped, tag = 'scoped memory for fp8_linear_prepared.3']
    %374 = vst [vmem:[#allocation14] sm:$0xff] %v156
    %s375 = scalar_lea.vmem [#allocation14], 6
    %v376 = vld [vmem:[%s375] sm:$0x3]
    %v377 = vunpack.c.0.f8e4m3b11 %v376
    %v378 = vunpack.c.1.f8e4m3b11 %v376
    %v379 = vunpack.c.2.f8e4m3b11 %v376
    %v380 = vunpack.c.3.f8e4m3b11 %v376
    %v381 = vand.u32 2147483647, %v377
    %vm382 = vcmp.gt.f32.partialorder %v381, 29.0
    %vm383 = vcmp.ne.f32.partialorder %v377, %v377
    %v384 = vmul.f32 %v377, 16.0
    %v385 = vsel %vm383, -0.0, %v384
    %v386 = vsel %vm382, nan, %v385
    %v387 = vand.u32 2147483647, %v378
    %vm388 = vcmp.gt.f32.partialorder %v387, 29.0
    %vm389 = vcmp.ne.f32.partialorder %v378, %v378
    %v390 = vmul.f32 %v378, 16.0
    %v391 = vsel %vm389, -0.0, %v390
    %v392 = vsel %vm388, nan, %v391
    %v393 = vand.u32 2147483647, %v379
    %vm394 = vcmp.gt.f32.partialorder %v393, 29.0
    %vm395 = vcmp.ne.f32.partialorder %v379, %v379
    %v396 = vmul.f32 %v379, 16.0
    %v397 = vsel %vm395, -0.0, %v396
    %v398 = vsel %vm394, nan, %v397
    %v399 = vand.u32 2147483647, %v380
    %vm400 = vcmp.gt.f32.partialorder %v399, 29.0
    %vm401 = vcmp.ne.f32.partialorder %v380, %v380
    %v402 = vmul.f32 %v380, 16.0
    %v403 = vsel %vm401, -0.0, %v402
    %v404 = vsel %vm400, nan, %v403
  $region38: #{fp8_linear_prepared.3} parent=0
    #allocation15 [shape = 'u8[4096]{0}', space=vmem, size = 0x1000, scoped, tag = 'scoped memory for fp8_linear_prepared.3']
    %405 = vst [vmem:[#allocation15] sm:$0xff] %v157
    %v406 = vld [vmem:[#allocation15] sm:$0x3]
    %v407 = vunpack.c.0.f8e4m3b11 %v406
    %v408 = vunpack.c.1.f8e4m3b11 %v406
    %v409 = vunpack.c.2.f8e4m3b11 %v406
    %v410 = vunpack.c.3.f8e4m3b11 %v406
    %v411 = vand.u32 2147483647, %v407
    %vm412 = vcmp.gt.f32.partialorder %v411, 29.0
    %vm413 = vcmp.ne.f32.partialorder %v407, %v407
    %v414 = vmul.f32 %v407, 16.0
    %v415 = vsel %vm413, -0.0, %v414
    %v416 = vsel %vm412, nan, %v415
    %v417 = vand.u32 2147483647, %v408
    %vm418 = vcmp.gt.f32.partialorder %v417, 29.0
    %vm419 = vcmp.ne.f32.partialorder %v408, %v408
    %v420 = vmul.f32 %v408, 16.0
    %v421 = vsel %vm419, -0.0, %v420
    %v422 = vsel %vm418, nan, %v421
    %v423 = vand.u32 2147483647, %v409
    %vm424 = vcmp.gt.f32.partialorder %v423, 29.0
    %vm425 = vcmp.ne.f32.partialorder %v409, %v409
    %v426 = vmul.f32 %v409, 16.0
    %v427 = vsel %vm425, -0.0, %v426
    %v428 = vsel %vm424, nan, %v427
    %v429 = vand.u32 2147483647, %v410
    %vm430 = vcmp.gt.f32.partialorder %v429, 29.0
    %vm431 = vcmp.ne.f32.partialorder %v410, %v410
    %v432 = vmul.f32 %v410, 16.0
    %v433 = vsel %vm431, -0.0, %v432
    %v434 = vsel %vm430, nan, %v433
  $region39: #{fp8_linear_prepared.3} parent=0
    #allocation16 [shape = 'u8[4096]{0}', space=vmem, size = 0x1000, scoped, tag = 'scoped memory for fp8_linear_prepared.3']
    %435 = vst [vmem:[#allocation16] sm:$0xff] %v157
    %s436 = scalar_lea.vmem [#allocation16], 2
    %v437 = vld [vmem:[%s436] sm:$0x3]
    %v438 = vunpack.c.0.f8e4m3b11 %v437
    %v439 = vunpack.c.1.f8e4m3b11 %v437
    %v440 = vunpack.c.2.f8e4m3b11 %v437
    %v441 = vunpack.c.3.f8e4m3b11 %v437
    %v442 = vand.u32 2147483647, %v438
    %vm443 = vcmp.gt.f32.partialorder %v442, 29.0
    %vm444 = vcmp.ne.f32.partialorder %v438, %v438
    %v445 = vmul.f32 %v438, 16.0
    %v446 = vsel %vm444, -0.0, %v445
    %v447 = vsel %vm443, nan, %v446
    %v448 = vand.u32 2147483647, %v439
    %vm449 = vcmp.gt.f32.partialorder %v448, 29.0
    %vm450 = vcmp.ne.f32.partialorder %v439, %v439
    %v451 = vmul.f32 %v439, 16.0
    %v452 = vsel %vm450, -0.0, %v451
    %v453 = vsel %vm449, nan, %v452
    %v454 = vand.u32 2147483647, %v440
    %vm455 = vcmp.gt.f32.partialorder %v454, 29.0
    %vm456 = vcmp.ne.f32.partialorder %v440, %v440
    %v457 = vmul.f32 %v440, 16.0
    %v458 = vsel %vm456, -0.0, %v457
    %v459 = vsel %vm455, nan, %v458
    %v460 = vand.u32 2147483647, %v441
    %vm461 = vcmp.gt.f32.partialorder %v460, 29.0
    %vm462 = vcmp.ne.f32.partialorder %v441, %v441
    %v463 = vmul.f32 %v441, 16.0
    %v464 = vsel %vm462, -0.0, %v463
    %v465 = vsel %vm461, nan, %v464
  $region40: #{fp8_linear_prepared.3} parent=0
    #allocation17 [shape = 'u8[4096]{0}', space=vmem, size = 0x1000, scoped, tag = 'scoped memory for fp8_linear_prepared.3']
    %466 = vst [vmem:[#allocation17] sm:$0xff] %v157
    %s467 = scalar_lea.vmem [#allocation17], 4
    %v468 = vld [vmem:[%s467] sm:$0x3]
    %v469 = vunpack.c.0.f8e4m3b11 %v468
    %v470 = vunpack.c.1.f8e4m3b11 %v468
    %v471 = vunpack.c.2.f8e4m3b11 %v468
    %v472 = vunpack.c.3.f8e4m3b11 %v468
    %v473 = vand.u32 2147483647, %v469
    %vm474 = vcmp.gt.f32.partialorder %v473, 29.0
    %vm475 = vcmp.ne.f32.partialorder %v469, %v469
    %v476 = vmul.f32 %v469, 16.0
    %v477 = vsel %vm475, -0.0, %v476
    %v478 = vsel %vm474, nan, %v477
    %v479 = vand.u32 2147483647, %v470
    %vm480 = vcmp.gt.f32.partialorder %v479, 29.0
    %vm481 = vcmp.ne.f32.partialorder %v470, %v470
    %v482 = vmul.f32 %v470, 16.0
    %v483 = vsel %vm481, -0.0, %v482
    %v484 = vsel %vm480, nan, %v483
    %v485 = vand.u32 2147483647, %v471
    %vm486 = vcmp.gt.f32.partialorder %v485, 29.0
    %vm487 = vcmp.ne.f32.partialorder %v471, %v471
    %v488 = vmul.f32 %v471, 16.0
    %v489 = vsel %vm487, -0.0, %v488
    %v490 = vsel %vm486, nan, %v489
    %v491 = vand.u32 2147483647, %v472
    %vm492 = vcmp.gt.f32.partialorder %v491, 29.0
    %vm493 = vcmp.ne.f32.partialorder %v472, %v472
    %v494 = vmul.f32 %v472, 16.0
    %v495 = vsel %vm493, -0.0, %v494
    %v496 = vsel %vm492, nan, %v495
  $region41: #{fp8_linear_prepared.3} parent=0
    #allocation18 [shape = 'u8[4096]{0}', space=vmem, size = 0x1000, scoped, tag = 'scoped memory for fp8_linear_prepared.3']
    %497 = vst [vmem:[#allocation18] sm:$0xff] %v157
    %s498 = scalar_lea.vmem [#allocation18], 6
    %v499 = vld [vmem:[%s498] sm:$0x3]
    %v500 = vunpack.c.0.f8e4m3b11 %v499
    %v501 = vunpack.c.1.f8e4m3b11 %v499
    %v502 = vunpack.c.2.f8e4m3b11 %v499
    %v503 = vunpack.c.3.f8e4m3b11 %v499
    %v504 = vand.u32 2147483647, %v500
    %vm505 = vcmp.gt.f32.partialorder %v504, 29.0
    %vm506 = vcmp.ne.f32.partialorder %v500, %v500
    %v507 = vmul.f32 %v500, 16.0
    %v508 = vsel %vm506, -0.0, %v507
    %v509 = vsel %vm505, nan, %v508
    %v510 = vand.u32 2147483647, %v501
    %vm511 = vcmp.gt.f32.partialorder %v510, 29.0
    %vm512 = vcmp.ne.f32.partialorder %v501, %v501
    %v513 = vmul.f32 %v501, 16.0
    %v514 = vsel %vm512, -0.0, %v513
    %v515 = vsel %vm511, nan, %v514
    %v516 = vand.u32 2147483647, %v502
    %vm517 = vcmp.gt.f32.partialorder %v516, 29.0
    %vm518 = vcmp.ne.f32.partialorder %v502, %v502
    %v519 = vmul.f32 %v502, 16.0
    %v520 = vsel %vm518, -0.0, %v519
    %v521 = vsel %vm517, nan, %v520
    %v522 = vand.u32 2147483647, %v503
    %vm523 = vcmp.gt.f32.partialorder %v522, 29.0
    %vm524 = vcmp.ne.f32.partialorder %v503, %v503
    %v525 = vmul.f32 %v503, 16.0
    %v526 = vsel %vm524, -0.0, %v525
    %v527 = vsel %vm523, nan, %v526
  $region42: #{fp8_linear_prepared.3} parent=0
    #allocation19 [shape = 'u8[4096]{0}', space=vmem, size = 0x1000, scoped, tag = 'scoped memory for fp8_linear_prepared.3']
    %528 = vst [vmem:[#allocation19] sm:$0xff] %v158
    %v529 = vld [vmem:[#allocation19] sm:$0x3]
    %v530 = vunpack.c.0.f8e4m3b11 %v529
    %v531 = vunpack.c.1.f8e4m3b11 %v529
    %v532 = vunpack.c.2.f8e4m3b11 %v529
    %v533 = vunpack.c.3.f8e4m3b11 %v529
    %v534 = vand.u32 2147483647, %v530
    %vm535 = vcmp.gt.f32.partialorder %v534, 29.0
    %vm536 = vcmp.ne.f32.partialorder %v530, %v530
    %v537 = vmul.f32 %v530, 16.0
    %v538 = vsel %vm536, -0.0, %v537
    %v539 = vsel %vm535, nan, %v538
    %v540 = vand.u32 2147483647, %v531
    %vm541 = vcmp.gt.f32.partialorder %v540, 29.0
    %vm542 = vcmp.ne.f32.partialorder %v531, %v531
    %v543 = vmul.f32 %v531, 16.0
    %v544 = vsel %vm542, -0.0, %v543
    %v545 = vsel %vm541, nan, %v544
    %v546 = vand.u32 2147483647, %v532
    %vm547 = vcmp.gt.f32.partialorder %v546, 29.0
    %vm548 = vcmp.ne.f32.partialorder %v532, %v532
    %v549 = vmul.f32 %v532, 16.0
    %v550 = vsel %vm548, -0.0, %v549
    %v551 = vsel %vm547, nan, %v550
    %v552 = vand.u32 2147483647, %v533
    %vm553 = vcmp.gt.f32.partialorder %v552, 29.0
    %vm554 = vcmp.ne.f32.partialorder %v533, %v533
    %v555 = vmul.f32 %v533, 16.0
    %v556 = vsel %vm554, -0.0, %v555
    %v557 = vsel %vm553, nan, %v556
  $region43: #{fp8_linear_prepared.3} parent=0
    #allocation20 [shape = 'u8[4096]{0}', space=vmem, size = 0x1000, scoped, tag = 'scoped memory for fp8_linear_prepared.3']
    %558 = vst [vmem:[#allocation20] sm:$0xff] %v158
    %s559 = scalar_lea.vmem [#allocation20], 2
    %v560 = vld [vmem:[%s559] sm:$0x3]
    %v561 = vunpack.c.0.f8e4m3b11 %v560
    %v562 = vunpack.c.1.f8e4m3b11 %v560
    %v563 = vunpack.c.2.f8e4m3b11 %v560
    %v564 = vunpack.c.3.f8e4m3b11 %v560
    %v565 = vand.u32 2147483647, %v561
    %vm566 = vcmp.gt.f32.partialorder %v565, 29.0
    %vm567 = vcmp.ne.f32.partialorder %v561, %v561
    %v568 = vmul.f32 %v561, 16.0
    %v569 = vsel %vm567, -0.0, %v568
    %v570 = vsel %vm566, nan, %v569
    %v571 = vand.u32 2147483647, %v562
    %vm572 = vcmp.gt.f32.partialorder %v571, 29.0
    %vm573 = vcmp.ne.f32.partialorder %v562, %v562
    %v574 = vmul.f32 %v562, 16.0
    %v575 = vsel %vm573, -0.0, %v574
    %v576 = vsel %vm572, nan, %v575
    %v577 = vand.u32 2147483647, %v563
    %vm578 = vcmp.gt.f32.partialorder %v577, 29.0
    %vm579 = vcmp.ne.f32.partialorder %v563, %v563
    %v580 = vmul.f32 %v563, 16.0
    %v581 = vsel %vm579, -0.0, %v580
    %v582 = vsel %vm578, nan, %v581
    %v583 = vand.u32 2147483647, %v564
    %vm584 = vcmp.gt.f32.partialorder %v583, 29.0
    %vm585 = vcmp.ne.f32.partialorder %v564, %v564
    %v586 = vmul.f32 %v564, 16.0
    %v587 = vsel %vm585, -0.0, %v586
    %v588 = vsel %vm584, nan, %v587
  $region44: #{fp8_linear_prepared.3} parent=0
    #allocation21 [shape = 'u8[4096]{0}', space=vmem, size = 0x1000, scoped, tag = 'scoped memory for fp8_linear_prepared.3']
    %589 = vst [vmem:[#allocation21] sm:$0xff] %v158
    %s590 = scalar_lea.vmem [#allocation21], 4
    %v591 = vld [vmem:[%s590] sm:$0x3]
    %v592 = vunpack.c.0.f8e4m3b11 %v591
    %v593 = vunpack.c.1.f8e4m3b11 %v591
    %v594 = vunpack.c.2.f8e4m3b11 %v591
    %v595 = vunpack.c.3.f8e4m3b11 %v591
    %v596 = vand.u32 2147483647, %v592
    %vm597 = vcmp.gt.f32.partialorder %v596, 29.0
    %vm598 = vcmp.ne.f32.partialorder %v592, %v592
    %v599 = vmul.f32 %v592, 16.0
    %v600 = vsel %vm598, -0.0, %v599
    %v601 = vsel %vm597, nan, %v600
    %v602 = vand.u32 2147483647, %v593
    %vm603 = vcmp.gt.f32.partialorder %v602, 29.0
    %vm604 = vcmp.ne.f32.partialorder %v593, %v593
    %v605 = vmul.f32 %v593, 16.0
    %v606 = vsel %vm604, -0.0, %v605
    %v607 = vsel %vm603, nan, %v606
    %v608 = vand.u32 2147483647, %v594
    %vm609 = vcmp.gt.f32.partialorder %v608, 29.0
    %vm610 = vcmp.ne.f32.partialorder %v594, %v594
    %v611 = vmul.f32 %v594, 16.0
    %v612 = vsel %vm610, -0.0, %v611
    %v613 = vsel %vm609, nan, %v612
    %v614 = vand.u32 2147483647, %v595
    %vm615 = vcmp.gt.f32.partialorder %v614, 29.0
    %vm616 = vcmp.ne.f32.partialorder %v595, %v595
    %v617 = vmul.f32 %v595, 16.0
    %v618 = vsel %vm616, -0.0, %v617
    %v619 = vsel %vm615, nan, %v618
  $region45: #{fp8_linear_prepared.3} parent=0
    #allocation22 [shape = 'u8[4096]{0}', space=vmem, size = 0x1000, scoped, tag = 'scoped memory for fp8_linear_prepared.3']
    %620 = vst [vmem:[#allocation22] sm:$0xff] %v158
    %s621 = scalar_lea.vmem [#allocation22], 6
    %v622 = vld [vmem:[%s621] sm:$0x3]
    %v623 = vunpack.c.0.f8e4m3b11 %v622
    %v624 = vunpack.c.1.f8e4m3b11 %v622
    %v625 = vunpack.c.2.f8e4m3b11 %v622
    %v626 = vunpack.c.3.f8e4m3b11 %v622
    %v627 = vand.u32 2147483647, %v623
    %vm628 = vcmp.gt.f32.partialorder %v627, 29.0
    %vm629 = vcmp.ne.f32.partialorder %v623, %v623
    %v630 = vmul.f32 %v623, 16.0
    %v631 = vsel %vm629, -0.0, %v630
    %v632 = vsel %vm628, nan, %v631
    %v633 = vand.u32 2147483647, %v624
    %vm634 = vcmp.gt.f32.partialorder %v633, 29.0
    %vm635 = vcmp.ne.f32.partialorder %v624, %v624
    %v636 = vmul.f32 %v624, 16.0
    %v637 = vsel %vm635, -0.0, %v636
    %v638 = vsel %vm634, nan, %v637
    %v639 = vand.u32 2147483647, %v625
    %vm640 = vcmp.gt.f32.partialorder %v639, 29.0
    %vm641 = vcmp.ne.f32.partialorder %v625, %v625
    %v642 = vmul.f32 %v625, 16.0
    %v643 = vsel %vm641, -0.0, %v642
    %v644 = vsel %vm640, nan, %v643
    %v645 = vand.u32 2147483647, %v626
    %vm646 = vcmp.gt.f32.partialorder %v645, 29.0
    %vm647 = vcmp.ne.f32.partialorder %v626, %v626
    %v648 = vmul.f32 %v626, 16.0
    %v649 = vsel %vm647, -0.0, %v648
    %v650 = vsel %vm646, nan, %v649
  %v651 = vpack.c.bf16 %v201, %v170
  %v652 = vpack.c.bf16 %v263, %v232
  %v653 = vpack.c.bf16 %v324, %v293
  %v654 = vpack.c.bf16 %v386, %v355
  %v655 = vpack.c.bf16 %v447, %v416
  %v656 = vpack.c.bf16 %v509, %v478
  %v657 = vpack.c.bf16 %v570, %v539
  %v658 = vpack.c.bf16 %v632, %v601
  %v659 = vld [vmem:[#allocation2] sm:$0xff]
  %v660 = vld [vmem:[#allocation2 + $0x8] sm:$0xff]
  %v661 = vld [vmem:[#allocation2 + $0x10] sm:$0xff]
  %v662 = vld [vmem:[#allocation2 + $0x18] sm:$0xff]
  %663 = vmatprep.subr.bf16.mxu0 0
  %664 = vmatpush1.bf16.msra.mxu0 %v658
  %665 = vmatprep.subr.bf16.mxu0 0
  %666 = vmatpush1.bf16.msra.mxu0 %v657
  %667 = vmatprep.subr.bf16.mxu0 0
  %668 = vmatpush1.bf16.msra.mxu0 %v656
  %669 = vmatprep.subr.bf16.mxu0 0
  %670 = vmatpush1.bf16.msra.mxu0 %v655
  %671 = vmatprep.subr.bf16.mxu0 0
  %672 = vmatpush1.bf16.msra.mxu0 %v654
  %673 = vmatprep.subr.bf16.mxu0 0
  %674 = vmatpush1.bf16.msra.mxu0 %v653
  %675 = vmatprep.subr.bf16.mxu0 0
  %676 = vmatpush1.bf16.msra.mxu0 %v652
  %677 = vmatprep.subr.bf16.mxu0 0
  %678 = vmatpush1.bf16.msra.mxu0 %v651
  %679 = vmatprep.subr.bf16.mxu0 0
  %680 = vmatpush2.bf16.msra.mxu0 0
  %681 = vmatprep.subr.bf16.mxu0 0
  %682 = vmatpush2.bf16.msra.mxu0 0
  %683 = vmatprep.subr.bf16.mxu0 0
  %684 = vmatpush2.bf16.msra.mxu0 0
  %685 = vmatprep.subr.bf16.mxu0 0
  %686 = vmatpush2.bf16.msra.mxu0 0
  %687 = vmatprep.subr.bf16.mxu0 0
  %688 = vmatpush2.bf16.msra.mxu0 0
  %689 = vmatprep.subr.bf16.mxu0 0
  %690 = vmatpush2.bf16.msra.mxu0 0
  %691 = vmatprep.subr.bf16.mxu0 0
  %692 = vmatpush2.bf16.msra.mxu0 0
  %693 = vmatprep.subr.bf16.mxu0 0
  %694 = vmatpush2.bf16.msra.mxu0 0
  %695 = vmatprep.mubr.bf16.mxu0 0
  %696 = vmatmul.mubr.bf16.gmra.mxu0 %v153
  %v697 = vpop.f32.mrf.mxu0
  %v698 = vadd.f32 0.0, %v697
  %v699 = vpop.f32.mrf.mxu0
  %v700 = vpop.f32.mrf.mxu0
  %v701 = vadd.f32 0.0, %v700
  %v702 = vpop.f32.mrf.mxu0
  %703 = vmatprep.mubr.bf16.mxu0 0
  %704 = vmatmul.mubr.bf16.gmra.mxu0 %v154
  %v705 = vpop.f32.mrf.mxu0
  %v706 = vadd.f32 0.0, %v705
  %v707 = vpop.f32.mrf.mxu0
  %v708 = vpop.f32.mrf.mxu0
  %v709 = vadd.f32 0.0, %v708
  %v710 = vpop.f32.mrf.mxu0
  %711 = vdwg.mxu0
  %v712 = vadd.f32 %v659, %v698
  %v713 = vadd.f32 %v660, %v701
  %v714 = vadd.f32 %v661, %v706
  %v715 = vadd.f32 %v662, %v709
  %716 = vst [vmem:[#allocation2] sm:$0xff] %v712
  %717 = vst [vmem:[#allocation2 + $0x8] sm:$0xff] %v713
  %718 = vst [vmem:[#allocation2 + $0x10] sm:$0xff] %v714
  %719 = vst [vmem:[#allocation2 + $0x18] sm:$0xff] %v715
  // Predicated region
  $region46: #{fp8_linear_prepared.3} parent=0 // pred_check
    %p720 = pneg %p21
  $region47: #{fp8_linear_prepared.3} parent=0 // pred_check_branch
    %722 = sbr.rel (%p720) target = $region49
  $region48: #{fp8_linear_prepared.3} parent=0 // pred_region
    %v723 = vld [vmem:[#allocation2] sm:$0xff]
    %v724 = vld [vmem:[#allocation2 + $0x8] sm:$0xff]
    %v725 = vld [vmem:[#allocation2 + $0x10] sm:$0xff]
    %v726 = vld [vmem:[#allocation2 + $0x18] sm:$0xff]
    %v727 = vld [vmem:[%s1] sm:$0xff]
    %v728 = vld [vmem:[%s1 + $0x8] sm:$0xff]
    %v729 = vld [vmem:[%s1 + $0x10] sm:$0xff]
    %v730 = vld [vmem:[%s1 + $0x18] sm:$0xff]
    %732 = vset.pattern.permute.xlu0 0
    %733 = vperm.xlu0 %732, %v727
    %v734 = vpop.permute.xlu0 %733
    %737 = vset.pattern.permute.xlu0 0
    %738 = vperm.xlu0 %737, %v728
    %v739 = vpop.permute.xlu0 %738
    %742 = vset.pattern.permute.xlu0 0
    %743 = vperm.xlu0 %742, %v729
    %v744 = vpop.permute.xlu0 %743
    %747 = vset.pattern.permute.xlu0 0
    %748 = vperm.xlu0 %747, %v730
    %v749 = vpop.permute.xlu0 %748
    %v751 = vmul.f32 %v723, %v734
    %v752 = vmul.f32 %v724, %v739
    %v753 = vmul.f32 %v725, %v744
    %v754 = vmul.f32 %v726, %v749
    %v755 = vld [vmem:[%s3] sm:$0x1]
    %v757 = vlaneseq
    %v758 = vshrl.u32 %v757, 7
    %v759 = vsub.s32 0, %v758
    %v760 = vrot.slane %v755, %v759
    %v762 = vmul.f32 %v751, %v760
    %v763 = vmul.f32 %v752, %v760
    %v764 = vmul.f32 %v753, %v760
    %v765 = vmul.f32 %v754, %v760
    %v766 = vld [vmem:[%s4] sm:$0x1]
    %v768 = vlaneseq
    %v769 = vshrl.u32 %v768, 7
    %v770 = vsub.s32 0, %v769
    %v771 = vrot.slane %v766, %v770
    %v773 = vadd.f32 %v762, %v771
    %v774 = vadd.f32 %v763, %v771
    %v775 = vadd.f32 %v764, %v771
    %v776 = vadd.f32 %v765, %v771
    %v777 = vpack.c.bf16 %v774, %v773
    %v778 = vpack.c.bf16 %v776, %v775
    %v781 = vunpack.c.l.b16 %v777
    %v782 = vunpack.c.h.b16 %v777
    %v783 = vunpack.c.l.b16 %v778
    %v784 = vunpack.c.h.b16 %v778
    %v785 = vpack.c.b16 %v781, %v781
    %v786 = vpack.c.b16 %v782, %v782
    %v787 = vpack.c.b16 %v783, %v783
    %v788 = vpack.c.b16 %v784, %v784
    %793 = vst [vmem:[%s5] sm:$0xf] %v785
    %794 = vst [vmem:[%s5 + $0x4] sm:$0xf] %v786
    %795 = vst [vmem:[%s5 + $0x8] sm:$0xf] %v787
    %796 = vst [vmem:[%s5 + $0xc] sm:$0xf] %v788
  $region49: #{fp8_linear_prepared.3} parent=0 // pred_fallthru
    _
  // Predicated region
  $region50: #{fp8_linear_prepared.3} parent=0 // pred_check
    _
  $region51: #{fp8_linear_prepared.3} parent=0 // pred_check_branch
    %798 = sbr.rel (0) target = $region53
  $region52: #{fp8_linear_prepared.3} parent=0 // pred_region
    _
  $region53: #{fp8_linear_prepared.3} parent=0 // pred_fallthru
    _
  // Predicated region
  $region54: #{fp8_linear_prepared.3} parent=0 // pred_check
    _
  $region55: #{fp8_linear_prepared.3} parent=0 // pred_check_branch
    %800 = sbr.rel (0) target = $region57
  $region56: #{fp8_linear_prepared.3} parent=0 // pred_region
    _
  $region57: #{fp8_linear_prepared.3} parent=0 // pred_fallthru
    _

</llo_original>
